<compile_context>
chip_gen: v6e
topology: v6e:2x2x1
jax: 0.10.0
libtpu: 0.0.40
codegen_flags: <defaults>
</compile_context>

<pallas_src>
import functools

import jax
import jax.numpy as jnp
from jax import lax
from jax.experimental import pallas as pl
from jax.experimental.pallas import tpu as pltpu

LANE = 128       # lane-dense feature padding (vreg lane width)
SUBLANE = 16     # row padding (covers bf16 sublane packing)


def _round_up(v, m):
    return (v + m - 1) // m * m


def _pad2(a, rows, cols):
    """Zero-pad the last two dims of `a` up to (rows, cols)."""
    r, c = a.shape[-2], a.shape[-1]
    pad = [(0, 0)] * (a.ndim - 2) + [(0, rows - r), (0, cols - c)]
    return jnp.pad(a, pad)


# ----------------------------------------------------------------------------
# One-time preparation (hoisted out of the per-call jitted path)
# ----------------------------------------------------------------------------
def prepare_block_params(params):
    """Pad every weight per-dimension to a 128-lane width, cast matmul weights
    to bf16, and return a flat per-layer argument list + logical dims."""
    layer_arrays = []
    layer_dims = []
    for p in params:
        d_in, d_mid = p["w_ffn"].shape
        d_mid2, d_out = p["w_gcn"].shape
        assert d_mid == d_mid2
        fpi, fpm, fpo = (_round_up(d, LANE) for d in (d_in, d_mid, d_out))
        layer_arrays += [
            _pad2(p["w_ffn"], fpi, fpm).astype(jnp.bfloat16),
            _pad2(p["b_ffn"], 1, fpm),
            _pad2(p["w_gcn"], fpm, fpo).astype(jnp.bfloat16),
            _pad2(p["b_gcn"], 1, fpo),
            _pad2(p["bn_scale"], 1, fpo),
            _pad2(p["bn_shift"], 1, fpo),
        ]
        layer_dims.append((d_in, d_mid, d_out))
    return layer_arrays, tuple(layer_dims)


def prepare_adj(adj):
    """Per-graph adjacency prep: pad rows/cols to SUBLANE multiple, cast bf16."""
    n = adj.shape[-1]
    np_ = _round_up(n, SUBLANE)
    return _pad2(adj, np_, np_).astype(jnp.bfloat16)


# ----------------------------------------------------------------------------
# Fused Pallas kernel: in-kernel gather + L x (FFN + GCN) + BN affine + residual
# ----------------------------------------------------------------------------
def fused_block_kernel(idx_ref, x_ref, adj_ref, *rest,
                       num_layers, start_second, mu):
    out_ref = rest[-1]
    layer_refs = rest[:-1]

    np_ = x_ref.shape[0]
    x_f32 = x_ref[...]                                       # (NP, FPin) f32

    # One-hot row-selection matrix for index_select: onehot[i, j] = (j == idx[i])
    col = lax.broadcasted_iota(jnp.int32, (np_, np_), 1)
    onehot = (col == idx_ref[...]).astype(jnp.float32)       # (NP, NP)

    identity = None
    if not start_second:
        # identity = input.index_select(0, out_index)  (exact f32 values)
        identity = jnp.dot(onehot, x_f32, preferred_element_type=jnp.float32)

    act_mm = x_f32.astype(jnp.bfloat16)                      # bf16 MXU operand
    act_f32 = None
    for k in range(num_layers):                              # static unroll (L=2)
        wf, bf, wg, bg, bns, bnb = layer_refs[6 * k:6 * k + 6]

        # ---- FFN_Block: relu(act @ W_ffn + b_ffn) -- bf16 MXU, f32 accumulate
        y = jnp.dot(act_mm, wf[...], preferred_element_type=jnp.float32)
        y = jnp.maximum(y + bf[...], 0.0)
        if start_second and k == 0:
            # identity = first_FFN_output.index_select(0, out_index)
            identity = jnp.dot(onehot, y, preferred_element_type=jnp.float32)

        # ---- GCN_Block (mix_first=True): relu((adj @ y) @ W_gcn + b_gcn)
        mixed = jnp.dot(adj_ref[k], y.astype(jnp.bfloat16),
                        preferred_element_type=jnp.float32)
        z = jnp.dot(mixed.astype(jnp.bfloat16), wg[...],
                    preferred_element_type=jnp.float32)
        z = jnp.maximum(z + bg[...], 0.0)

        # BatchNorm1d (eval) folded to per-feature affine; Dropout(eval) = id.
        act_f32 = z * bns[...] + bnb[...]
        act_mm = act_f32.astype(jnp.bfloat16)

    if mu is None:
        out_ref[...] = act_f32 + identity
    else:
        out_ref[...] = mu * act_f32 + (1.0 - mu) * identity


def fused_block_call(idx_col, x_p, adj_p, layer_arrays, *,
                     start_second, mu, logical):
    num_layers = len(layer_arrays) // 6
    np_, _ = x_p.shape
    fp_out = layer_arrays[6 * (num_layers - 1) + 2].shape[1]   # last W_gcn width

    vmem = pl.BlockSpec(memory_space=pltpu.MemorySpace.VMEM)
    args = [idx_col, x_p, adj_p, *layer_arrays]

    # Cost estimate from LOGICAL (unpadded) dims.
    n, layer_dims = logical
    gather_width = layer_dims[0][1] if start_second else layer_dims[0][0]
    flops = 2 * n * n * gather_width
    bytes_accessed = n * 4 + n * layer_dims[0][0] * 4          # idx + x(f32)
    for (d_in, d_mid, d_out) in layer_dims:
        flops += 2 * n * d_in * d_mid + 2 * n * n * d_mid + 2 * n * d_mid * d_out
        bytes_accessed += (d_in * d_mid + d_mid * d_out) * 2   # bf16 weights
        bytes_accessed += (d_mid + 3 * d_out) * 4              # bias + bn affine
        bytes_accessed += n * n * 2                            # adj layer (bf16)
    bytes_accessed += n * layer_dims[-1][2] * 4                # output

    kernel = functools.partial(fused_block_kernel, num_layers=num_layers,
                               start_second=start_second, mu=mu)
    return pl.pallas_call(
        kernel,
        out_shape=jax.ShapeDtypeStruct((np_, fp_out), jnp.float32),
        in_specs=[vmem] * len(args),
        out_specs=vmem,
        compiler_params=pltpu.CompilerParams(vmem_limit_bytes=64 * 1024 * 1024),
        cost_estimate=pl.CostEstimate(flops=int(flops), transcendentals=0,
                                      bytes_accessed=int(bytes_accessed)),
    )(*args)


# ----------------------------------------------------------------------------
# BasicResidualBlock forward (FFN=True, mix_first=True, eval mode)
# ----------------------------------------------------------------------------
def basic_residual_block_forward(layer_arrays, x, adj_p, out_index, *,
                                 layer_dims, mu=None, start_second=False):
    n, f_in = x.shape
    f_out = layer_dims[-1][2]
    np_ = adj_p.shape[-1]                       # padded row count (multiple of 16)
    fp_in = layer_arrays[0].shape[0]            # padded input width

    if start_second:
        # identity comes from the first FFN output -> requires hidden == output.
        assert layer_dims[0][1] == f_out, "start_second residual needs hidden == output"
    else:
        assert f_in == f_out, "residual from input needs input_size == output_size"

    # Tiny per-call glue: pad x rows/cols (f32, keeps identity exact) and pad
    # out_index (pads reference row 0 -> harmless, padded output rows sliced off).
    x_p = _pad2(x, np_, fp_in)
    idx_col = _pad2(out_index.reshape(n, 1).astype(jnp.int32), np_, 1)

    out_p = fused_block_call(idx_col, x_p, adj_p, layer_arrays,
                             start_second=start_second, mu=mu,
                             logical=(n, layer_dims))
    return out_p[:n, :f_out]


# ----------------------------------------------------------------------------
# Pure-JAX references.  matmul_dtype=jnp.bfloat16 mirrors the kernel's math path
# (bf16 MXU operands, f32 accumulate, f32 identity); jnp.float32 is full-precision
# module semantics.
# ----------------------------------------------------------------------------
def reference_forward(params, x, adj, out_index, *, mu=None, start_second=False,
                      matmul_dtype=jnp.float32):
    def mm(a, b):
        return jnp.dot(a.astype(matmul_dtype), b.astype(matmul_dtype),
                       preferred_element_type=jnp.float32)

    identity = None if start_second else jnp.take(x, out_index, axis=0)
    output = x
    for k, p in enumerate(params):
        y = jnp.maximum(mm(output, p["w_ffn"]) + p["b_ffn"], 0.0)
        if identity is None:
            identity = jnp.take(y, out_index, axis=0)
        mixed = mm(adj[k], y)
        z = jnp.maximum(mm(mixed, p["w_gcn"]) + p["b_gcn"], 0.0)
        output = z * p["bn_scale"] + p["bn_shift"]
    if mu is not None:
        return output * mu + (1.0 - mu) * identity
    return output + identity


# ----------------------------------------------------------------------------
# Deterministic parameter construction (mirrors __init__ shapes, layer_num=2)
# ----------------------------------------------------------------------------
def make_params(key, input_size, hidden_size, output_size, layer_num):
    assert layer_num == 2, "example instantiates layer_num=2"
    keys = jax.random.split(key, 12)
    eps = 1e-5

    def lin(kw, kb, fin, fout):
        w = 0.1 * jax.random.normal(kw, (fin, fout), jnp.float32)  # (in, out)
        b = 0.1 * jax.random.normal(kb, (1, fout), jnp.float32)
        return w, b

    def bn(kg, kb, f):
        gamma = 1.0 + 0.1 * jax.random.normal(kg, (1, f), jnp.float32)
        beta = 0.1 * jax.random.normal(kb, (1, f), jnp.float32)
        run_mean = jnp.zeros((1, f), jnp.float32)
        run_var = jnp.ones((1, f), jnp.float32)
        scale = gamma / jnp.sqrt(run_var + eps)
        shift = beta - run_mean * scale
        return scale, shift

    w_in, b_in = lin(keys[0], keys[1], input_size, hidden_size)
    w_mid, b_mid = lin(keys[2], keys[3], hidden_size, hidden_size)
    w_out, b_out = lin(keys[4], keys[5], hidden_size, output_size)
    bn0_s, bn0_b = bn(keys[6], keys[7], hidden_size)    # GCN_Block(fn, hidden)
    bn1_s, bn1_b = bn(keys[8], keys[9], output_size)    # GCN_Block(fn_out, output)

    pair0 = dict(w_ffn=w_in, b_ffn=b_in, w_gcn=w_mid, b_gcn=b_mid,
                 bn_scale=bn0_s, bn_shift=bn0_b)        # FFN(fn_in) + GCN(fn)
    pair1 = dict(w_ffn=w_mid, b_ffn=b_mid, w_gcn=w_out, b_gcn=b_out,
                 bn_scale=bn1_s, bn_shift=bn1_b)        # FFN(fn)    + GCN(fn_out)
    return [pair0, pair1]


# ----------------------------------------------------------------------------
if __name__ == "__main__":
    N = 16                 # number of graph nodes
    INPUT = 32             # input_size == output_size -> start_second = False
    HIDDEN = 32
    OUTPUT = 32
    LAYER_NUM = 2
    MU = None

    key = jax.random.PRNGKey(0)
    k_param, k_x, k_adj, k_idx = jax.random.split(key, 4)

    params = make_params(k_param, INPUT, HIDDEN, OUTPUT, LAYER_NUM)
    x = jax.random.normal(k_x, (N, INPUT), jnp.float32)
    adj = jax.random.normal(k_adj, (LAYER_NUM, N, N), jnp.float32) * 0.1
    out_index = jax.random.permutation(k_idx, jnp.arange(N, dtype=jnp.int32))

    start_second = (INPUT != OUTPUT)

    # ---- one-time prep (hoisted out of the per-call jitted path) ------------
    layer_arrays, layer_dims = prepare_block_params(params)
    adj_p = prepare_adj(adj)

    fwd = jax.jit(functools.partial(basic_residual_block_forward,
                                    layer_dims=layer_dims, mu=MU,
                                    start_second=start_second))
    out = jax.block_until_ready(fwd(layer_arrays, x, adj_p, out_index))

    # Tight check vs. a reference that mirrors the kernel's bf16-operand /
    # f32-accumulate math path; loose check vs. the full-f32 module semantics.
    ref_bf16 = reference_forward(params, x, adj, out_index, mu=MU,
                                 start_second=start_second,
                                 matmul_dtype=jnp.bfloat16)
    ref_f32 = reference_forward(params, x, adj, out_index, mu=MU,
                                start_second=start_second,
                                matmul_dtype=jnp.float32)

    assert out.shape == (N, OUTPUT)
    assert jnp.allclose(out, ref_bf16, atol=1e-3, rtol=1e-3), \
        "mismatch vs bf16-mirrored reference"
    assert jnp.allclose(out, ref_f32, atol=5e-2, rtol=5e-2), \
        "mismatch vs f32 reference"

    print("KERNEL_OK")
</pallas_src>

<mosaic_0001>
module attributes {stable_mosaic.version = 11 : i64} {
  func.func @fused_block_kernel(%arg0: memref<16x1xi32, #tpu.memory_space<vmem>>, %arg1: memref<16x128xf32, #tpu.memory_space<vmem>>, %arg2: memref<2x16x16xbf16, #tpu.memory_space<vmem>>, %arg3: memref<128x128xbf16, #tpu.memory_space<vmem>>, %arg4: memref<1x128xf32, #tpu.memory_space<vmem>>, %arg5: memref<128x128xbf16, #tpu.memory_space<vmem>>, %arg6: memref<1x128xf32, #tpu.memory_space<vmem>>, %arg7: memref<1x128xf32, #tpu.memory_space<vmem>>, %arg8: memref<1x128xf32, #tpu.memory_space<vmem>>, %arg9: memref<128x128xbf16, #tpu.memory_space<vmem>>, %arg10: memref<1x128xf32, #tpu.memory_space<vmem>>, %arg11: memref<128x128xbf16, #tpu.memory_space<vmem>>, %arg12: memref<1x128xf32, #tpu.memory_space<vmem>>, %arg13: memref<1x128xf32, #tpu.memory_space<vmem>>, %arg14: memref<1x128xf32, #tpu.memory_space<vmem>>, %arg15: memref<16x128xf32, #tpu.memory_space<vmem>>) attributes {dimension_semantics = [], scalar_prefetch = 0 : i64, scratch_operands = 0 : i64, tpu.core_type = #tpu.core_type<tc>} {
    %c0 = arith.constant 0 : index
    %c0_0 = arith.constant 0 : index
    %0 = vector.load %arg1[%c0, %c0_0] : memref<16x128xf32, #tpu.memory_space<vmem>>, vector<16x128xf32>
    %1 = tpu.iota {dimensions = array<i32: 1>} : vector<16x16xi32>
    %c0_1 = arith.constant 0 : index
    %c0_2 = arith.constant 0 : index
    %2 = vector.load %arg0[%c0_1, %c0_2] : memref<16x1xi32, #tpu.memory_space<vmem>>, vector<16x1xi32>
    %3 = vector.broadcast %2 : vector<16x1xi32> to vector<16x16xi32>
    %4 = arith.cmpi eq, %1, %3 : vector<16x16xi32>
    %5 = arith.extui %4 : vector<16x16xi1> to vector<16x16xi32>
    %6 = arith.sitofp %5 : vector<16x16xi32> to vector<16x16xf32>
    %cst = arith.constant dense<0.000000e+00> : vector<16x128xf32>
    %7 = tpu.matmul %6, %0, %cst {dimension_numbers = #tpu.dot_dimension_numbers<[1], [0], [0], [1], [0, 0, 1, 1], [], []>} : vector<16x16xf32>, vector<16x128xf32>, vector<16x128xf32> -> vector<16x128xf32>
    %8 = arith.truncf %0 : vector<16x128xf32> to vector<16x128xbf16>
    %c0_3 = arith.constant 0 : index
    %c0_4 = arith.constant 0 : index
    %9 = vector.load %arg3[%c0_3, %c0_4] : memref<128x128xbf16, #tpu.memory_space<vmem>>, vector<128x128xbf16>
    %cst_5 = arith.constant dense<0.000000e+00> : vector<16x128xf32>
    %10 = tpu.matmul %8, %9, %cst_5 {dimension_numbers = #tpu.dot_dimension_numbers<[1], [0], [0], [1], [0, 0, 1, 1], [], []>} : vector<16x128xbf16>, vector<128x128xbf16>, vector<16x128xf32> -> vector<16x128xf32>
    %c0_6 = arith.constant 0 : index
    %c0_7 = arith.constant 0 : index
    %11 = vector.load %arg4[%c0_6, %c0_7] : memref<1x128xf32, #tpu.memory_space<vmem>>, vector<1x128xf32>
    %12 = vector.broadcast %11 : vector<1x128xf32> to vector<16x128xf32>
    %13 = arith.addf %10, %12 : vector<16x128xf32>
    %cst_8 = arith.constant 0.000000e+00 : f32
    %14 = vector.broadcast %cst_8 : f32 to vector<16x128xf32>
    %15 = arith.maximumf %13, %14 : vector<16x128xf32>
    %c0_9 = arith.constant 0 : index
    %c0_10 = arith.constant 0 : index
    %c0_11 = arith.constant 0 : index
    %16 = vector.load %arg2[%c0_9, %c0_10, %c0_11] : memref<2x16x16xbf16, #tpu.memory_space<vmem>>, vector<1x16x16xbf16>
    %17 = vector.shape_cast %16 : vector<1x16x16xbf16> to vector<16x16xbf16>
    %18 = arith.truncf %15 : vector<16x128xf32> to vector<16x128xbf16>
    %cst_12 = arith.constant dense<0.000000e+00> : vector<16x128xf32>
    %19 = tpu.matmul %17, %18, %cst_12 {dimension_numbers = #tpu.dot_dimension_numbers<[1], [0], [0], [1], [0, 0, 1, 1], [], []>} : vector<16x16xbf16>, vector<16x128xbf16>, vector<16x128xf32> -> vector<16x128xf32>
    %20 = arith.truncf %19 : vector<16x128xf32> to vector<16x128xbf16>
    %c0_13 = arith.constant 0 : index
    %c0_14 = arith.constant 0 : index
    %21 = vector.load %arg5[%c0_13, %c0_14] : memref<128x128xbf16, #tpu.memory_space<vmem>>, vector<128x128xbf16>
    %cst_15 = arith.constant dense<0.000000e+00> : vector<16x128xf32>
    %22 = tpu.matmul %20, %21, %cst_15 {dimension_numbers = #tpu.dot_dimension_numbers<[1], [0], [0], [1], [0, 0, 1, 1], [], []>} : vector<16x128xbf16>, vector<128x128xbf16>, vector<16x128xf32> -> vector<16x128xf32>
    %c0_16 = arith.constant 0 : index
    %c0_17 = arith.constant 0 : index
    %23 = vector.load %arg6[%c0_16, %c0_17] : memref<1x128xf32, #tpu.memory_space<vmem>>, vector<1x128xf32>
    %24 = vector.broadcast %23 : vector<1x128xf32> to vector<16x128xf32>
    %25 = arith.addf %22, %24 : vector<16x128xf32>
    %cst_18 = arith.constant 0.000000e+00 : f32
    %26 = vector.broadcast %cst_18 : f32 to vector<16x128xf32>
    %27 = arith.maximumf %25, %26 : vector<16x128xf32>
    %c0_19 = arith.constant 0 : index
    %c0_20 = arith.constant 0 : index
    %28 = vector.load %arg7[%c0_19, %c0_20] : memref<1x128xf32, #tpu.memory_space<vmem>>, vector<1x128xf32>
    %29 = vector.broadcast %28 : vector<1x128xf32> to vector<16x128xf32>
    %30 = arith.mulf %27, %29 : vector<16x128xf32>
    %c0_21 = arith.constant 0 : index
    %c0_22 = arith.constant 0 : index
    %31 = vector.load %arg8[%c0_21, %c0_22] : memref<1x128xf32, #tpu.memory_space<vmem>>, vector<1x128xf32>
    %32 = vector.broadcast %31 : vector<1x128xf32> to vector<16x128xf32>
    %33 = arith.addf %30, %32 : vector<16x128xf32>
    %34 = arith.truncf %33 : vector<16x128xf32> to vector<16x128xbf16>
    %c0_23 = arith.constant 0 : index
    %c0_24 = arith.constant 0 : index
    %35 = vector.load %arg9[%c0_23, %c0_24] : memref<128x128xbf16, #tpu.memory_space<vmem>>, vector<128x128xbf16>
    %cst_25 = arith.constant dense<0.000000e+00> : vector<16x128xf32>
    %36 = tpu.matmul %34, %35, %cst_25 {dimension_numbers = #tpu.dot_dimension_numbers<[1], [0], [0], [1], [0, 0, 1, 1], [], []>} : vector<16x128xbf16>, vector<128x128xbf16>, vector<16x128xf32> -> vector<16x128xf32>
    %c0_26 = arith.constant 0 : index
    %c0_27 = arith.constant 0 : index
    %37 = vector.load %arg10[%c0_26, %c0_27] : memref<1x128xf32, #tpu.memory_space<vmem>>, vector<1x128xf32>
    %38 = vector.broadcast %37 : vector<1x128xf32> to vector<16x128xf32>
    %39 = arith.addf %36, %38 : vector<16x128xf32>
    %cst_28 = arith.constant 0.000000e+00 : f32
    %40 = vector.broadcast %cst_28 : f32 to vector<16x128xf32>
    %41 = arith.maximumf %39, %40 : vector<16x128xf32>
    %c1 = arith.constant 1 : index
    %c0_29 = arith.constant 0 : index
    %c0_30 = arith.constant 0 : index
    %42 = vector.load %arg2[%c1, %c0_29, %c0_30] : memref<2x16x16xbf16, #tpu.memory_space<vmem>>, vector<1x16x16xbf16>
    %43 = vector.shape_cast %42 : vector<1x16x16xbf16> to vector<16x16xbf16>
    %44 = arith.truncf %41 : vector<16x128xf32> to vector<16x128xbf16>
    %cst_31 = arith.constant dense<0.000000e+00> : vector<16x128xf32>
    %45 = tpu.matmul %43, %44, %cst_31 {dimension_numbers = #tpu.dot_dimension_numbers<[1], [0], [0], [1], [0, 0, 1, 1], [], []>} : vector<16x16xbf16>, vector<16x128xbf16>, vector<16x128xf32> -> vector<16x128xf32>
    %46 = arith.truncf %45 : vector<16x128xf32> to vector<16x128xbf16>
    %c0_32 = arith.constant 0 : index
    %c0_33 = arith.constant 0 : index
    %47 = vector.load %arg11[%c0_32, %c0_33] : memref<128x128xbf16, #tpu.memory_space<vmem>>, vector<128x128xbf16>
    %cst_34 = arith.constant dense<0.000000e+00> : vector<16x128xf32>
    %48 = tpu.matmul %46, %47, %cst_34 {dimension_numbers = #tpu.dot_dimension_numbers<[1], [0], [0], [1], [0, 0, 1, 1], [], []>} : vector<16x128xbf16>, vector<128x128xbf16>, vector<16x128xf32> -> vector<16x128xf32>
    %c0_35 = arith.constant 0 : index
    %c0_36 = arith.constant 0 : index
    %49 = vector.load %arg12[%c0_35, %c0_36] : memref<1x128xf32, #tpu.memory_space<vmem>>, vector<1x128xf32>
    %50 = vector.broadcast %49 : vector<1x128xf32> to vector<16x128xf32>
    %51 = arith.addf %48, %50 : vector<16x128xf32>
    %cst_37 = arith.constant 0.000000e+00 : f32
    %52 = vector.broadcast %cst_37 : f32 to vector<16x128xf32>
    %53 = arith.maximumf %51, %52 : vector<16x128xf32>
    %c0_38 = arith.constant 0 : index
    %c0_39 = arith.constant 0 : index
    %54 = vector.load %arg13[%c0_38, %c0_39] : memref<1x128xf32, #tpu.memory_space<vmem>>, vector<1x128xf32>
    %55 = vector.broadcast %54 : vector<1x128xf32> to vector<16x128xf32>
    %56 = arith.mulf %53, %55 : vector<16x128xf32>
    %c0_40 = arith.constant 0 : index
    %c0_41 = arith.constant 0 : index
    %57 = vector.load %arg14[%c0_40, %c0_41] : memref<1x128xf32, #tpu.memory_space<vmem>>, vector<1x128xf32>
    %58 = vector.broadcast %57 : vector<1x128xf32> to vector<16x128xf32>
    %59 = arith.addf %56, %58 : vector<16x128xf32>
    %60 = arith.addf %59, %7 : vector<16x128xf32>
    %c0_42 = arith.constant 0 : index
    %c0_43 = arith.constant 0 : index
    %61 = vector.load %arg15[%c0_42, %c0_43] : memref<16x128xf32, #tpu.memory_space<vmem>>, vector<16x128xf32>
    tpu.vector_store %arg15[%c0_42, %c0_43], %60 {strides = array<i32>} : memref<16x128xf32, #tpu.memory_space<vmem>>, vector<16x128xf32>,
    return
  }
}

</mosaic_0001>

<llo_original>
// kernel: basic_residual_block_forward.1
$region0: #{basic_residual_block_forward.1}
  #allocation0 [shape = 'u32[]', space=smem, size = 0x4, offset = 0x4, fixed_abs, tag = 'smem constant byte address 0x4 - core index']
  #allocation1 [shape = 'u32[144,128]{1,0:T(1,128)}', space=vmem, size = 0x12000, scoped, tag = 'internal scratch']
  %s0 = inlined_call_operand.vmem [shape: s32[16,1], index: 0, kind: input, shape index: {}]
  %s1 = inlined_call_operand.vmem [shape: f32[16,128], index: 1, kind: input, shape index: {}]
  %s2 = inlined_call_operand.hbm [shape: bf16[2,16,16], index: 2, kind: input, shape index: {}]
  %s3 = inlined_call_operand.hbm [shape: bf16[128,128], index: 3, kind: input, shape index: {}]
  %s4 = inlined_call_operand.vmem [shape: f32[1,128], index: 4, kind: input, shape index: {}]
  %s5 = inlined_call_operand.hbm [shape: bf16[128,128], index: 5, kind: input, shape index: {}]
  %s6 = inlined_call_operand.vmem [shape: f32[1,128], index: 6, kind: input, shape index: {}]
  %s7 = inlined_call_operand.hbm [shape: f32[1,128], index: 7, kind: input, shape index: {}]
  %s8 = inlined_call_operand.hbm [shape: f32[1,128], index: 8, kind: input, shape index: {}]
  %s9 = inlined_call_operand.hbm [shape: bf16[128,128], index: 9, kind: input, shape index: {}]
  %s10 = inlined_call_operand.hbm [shape: f32[1,128], index: 10, kind: input, shape index: {}]
  %s11 = inlined_call_operand.vmem [shape: bf16[128,128], index: 11, kind: input, shape index: {}]
  %s12 = inlined_call_operand.vmem [shape: f32[1,128], index: 12, kind: input, shape index: {}]
  %s13 = inlined_call_operand.vmem [shape: f32[1,128], index: 13, kind: input, shape index: {}]
  %s14 = inlined_call_operand.vmem [shape: f32[1,128], index: 14, kind: input, shape index: {}]
  %s15 = inlined_call_operand.hbm [shape: f32[16,128], index: 15, kind: output, shape index: {}]
  %s16 = sld [smem:[#allocation0]]
  $region98: #{basic_residual_block_forward.1} parent=0
    _
  %s18 = ssub.s32 1, %s16
  %s19 = scalar_select 0, %s18, %s16
  $region1: #{basic_residual_block_forward.1} parent=0
    #allocation2 [shape = 'u8[8192]{0}', space=vmem, size = 0x2000, scoped, tag = 'input window, operand 2, single buffered']
    #allocation3 [shape = 's32[1]{0}', space=sflag, size = 0x4, scoped, tag = 'scoped memory for basic_residual_block_forward.1']
    #allocation4 [shape = 's32[1]{0}', space=sflag, size = 0x4, scoped, tag = 'scoped memory for basic_residual_block_forward.1']
    #allocation5 [shape = 'u8[32768]{0}', space=vmem, size = 0x8000, scoped, tag = 'input window, operand 3, single buffered']
    #allocation6 [shape = 's32[1]{0}', space=sflag, size = 0x4, scoped, tag = 'scoped memory for basic_residual_block_forward.1']
    #allocation7 [shape = 'u8[32768]{0}', space=vmem, size = 0x8000, scoped, tag = 'input window, operand 5, single buffered']
    #allocation8 [shape = 'u8[512]{0}', space=vmem, size = 0x400, scoped, tag = 'input window, operand 7, single buffered']
    #allocation9 [shape = 's32[1]{0}', space=sflag, size = 0x4, scoped, tag = 'scoped memory for basic_residual_block_forward.1']
    #allocation10 [shape = 'u8[512]{0}', space=vmem, size = 0x400, scoped, tag = 'input window, operand 8, single buffered']
    #allocation11 [shape = 'u8[32768]{0}', space=vmem, size = 0x8000, scoped, tag = 'input window, operand 9, single buffered']
    #allocation12 [shape = 's32[1]{0}', space=sflag, size = 0x4, scoped, tag = 'scoped memory for basic_residual_block_forward.1']
    #allocation13 [shape = 'u8[512]{0}', space=vmem, size = 0x400, scoped, tag = 'input window, operand 10, single buffered']
    #allocation14 [shape = 'u8[8192]{0}', space=vmem, size = 0x2000, scoped, tag = 'output window, operand 0, single buffered']
    %20 = vsyncpa [#allocation3], 0
    %21 = vsyncpa [#allocation6], 0
    %22 = vsyncpa [#allocation9], 0
    %23 = vsyncpa [#allocation12], 0
    %24 = vsyncpa [#allocation4], 0
    // Predicated region
    $region2: #{basic_residual_block_forward.1} parent=1 // pred_check
      _
    $region3: #{basic_residual_block_forward.1} parent=1 // pred_check_branch
      %26 = sbr.rel (0) target = $region5
    $region4: #{basic_residual_block_forward.1} parent=1 // pred_region
      _
    $region5: #{basic_residual_block_forward.1} parent=1 // pred_fallthru
      _
    // Predicated region
    $region6: #{basic_residual_block_forward.1} parent=1 // pred_check
      _
    $region7: #{basic_residual_block_forward.1} parent=1 // pred_check_branch
      %28 = sbr.rel (0) target = $region9
    $region8: #{basic_residual_block_forward.1} parent=1 // pred_region
      _
    $region9: #{basic_residual_block_forward.1} parent=1 // pred_fallthru
      _
    // Predicated region
    $region10: #{basic_residual_block_forward.1} parent=1 // pred_check
      _
    $region11: #{basic_residual_block_forward.1} parent=1 // pred_check_branch
      %30 = sbr.rel (0) target = $region13
    $region12: #{basic_residual_block_forward.1} parent=1 // pred_region
      %s32 = ssub.s32 256, 256
      %33 = vsyncadd [#allocation3], %s32
      %s34 = sshll.u32 [#allocation2], 4
      %s35 = int_to_ptr.vmem [resolvable:$true] %s34
      %40 = dma.hbm_to_vmem [thread:$0]  %s2, 256, %s35, [#allocation3], 64, 64, 4
    $region13: #{basic_residual_block_forward.1} parent=1 // pred_fallthru
      _
    // Predicated region
    $region14: #{basic_residual_block_forward.1} parent=1 // pred_check
      _
    $region15: #{basic_residual_block_forward.1} parent=1 // pred_check_branch
      %42 = sbr.rel (0) target = $region17
    $region16: #{basic_residual_block_forward.1} parent=1 // pred_region
      %s44 = ssub.s32 1024, 1024
      %45 = vsyncadd [#allocation6], %s44
      %s46 = sshll.u32 [#allocation5], 4
      %s47 = int_to_ptr.vmem [resolvable:$true] %s46
      %52 = dma.hbm_to_vmem [thread:$0]  %s3, 1024, %s47, [#allocation6], 64, 64, 4
    $region17: #{basic_residual_block_forward.1} parent=1 // pred_fallthru
      _
    // Predicated region
    $region18: #{basic_residual_block_forward.1} parent=1 // pred_check
      _
    $region19: #{basic_residual_block_forward.1} parent=1 // pred_check_branch
      %54 = sbr.rel (0) target = $region21
    $region20: #{basic_residual_block_forward.1} parent=1 // pred_region
      _
    $region21: #{basic_residual_block_forward.1} parent=1 // pred_fallthru
      _
    // Predicated region
    $region22: #{basic_residual_block_forward.1} parent=1 // pred_check
      _
    $region23: #{basic_residual_block_forward.1} parent=1 // pred_check_branch
      %56 = sbr.rel (0) target = $region25
    $region24: #{basic_residual_block_forward.1} parent=1 // pred_region
      %s58 = ssub.s32 1024, 1024
      %59 = vsyncadd [#allocation6], %s58
      %s60 = sshll.u32 [#allocation7], 4
      %s61 = int_to_ptr.vmem [resolvable:$true] %s60
      %66 = dma.hbm_to_vmem [thread:$0]  %s5, 1024, %s61, [#allocation6], 64, 64, 4
    $region25: #{basic_residual_block_forward.1} parent=1 // pred_fallthru
      _
    // Predicated region
    $region26: #{basic_residual_block_forward.1} parent=1 // pred_check
      _
    $region27: #{basic_residual_block_forward.1} parent=1 // pred_check_branch
      %68 = sbr.rel (0) target = $region29
    $region28: #{basic_residual_block_forward.1} parent=1 // pred_region
      _
    $region29: #{basic_residual_block_forward.1} parent=1 // pred_fallthru
      _
    // Predicated region
    $region30: #{basic_residual_block_forward.1} parent=1 // pred_check
      _
    $region31: #{basic_residual_block_forward.1} parent=1 // pred_check_branch
      %70 = sbr.rel (0) target = $region33
    $region32: #{basic_residual_block_forward.1} parent=1 // pred_region
      %s72 = ssub.s32 16, 16
      %73 = vsyncadd [#allocation9], %s72
      %s75 = sshll.u32 [#allocation8], 4
      %s76 = int_to_ptr.vmem [resolvable:$true] %s75
      %78 = dma.hbm_to_vmem [thread:$0]  %s7, 16, %s76, [#allocation9]
    $region33: #{basic_residual_block_forward.1} parent=1 // pred_fallthru
      _
    // Predicated region
    $region34: #{basic_residual_block_forward.1} parent=1 // pred_check
      _
    $region35: #{basic_residual_block_forward.1} parent=1 // pred_check_branch
      %80 = sbr.rel (0) target = $region37
    $region36: #{basic_residual_block_forward.1} parent=1 // pred_region
      %s82 = ssub.s32 16, 16
      %83 = vsyncadd [#allocation9], %s82
      %s85 = sshll.u32 [#allocation10], 4
      %s86 = int_to_ptr.vmem [resolvable:$true] %s85
      %88 = dma.hbm_to_vmem [thread:$0]  %s8, 16, %s86, [#allocation9]
    $region37: #{basic_residual_block_forward.1} parent=1 // pred_fallthru
      _
    // Predicated region
    $region38: #{basic_residual_block_forward.1} parent=1 // pred_check
      _
    $region39: #{basic_residual_block_forward.1} parent=1 // pred_check_branch
      %90 = sbr.rel (0) target = $region41
    $region40: #{basic_residual_block_forward.1} parent=1 // pred_region
      %s92 = ssub.s32 1024, 1024
      %93 = vsyncadd [#allocation12], %s92
      %s94 = sshll.u32 [#allocation11], 4
      %s95 = int_to_ptr.vmem [resolvable:$true] %s94
      %100 = dma.hbm_to_vmem [thread:$0]  %s9, 1024, %s95, [#allocation12], 64, 64, 4
    $region41: #{basic_residual_block_forward.1} parent=1 // pred_fallthru
      _
    // Predicated region
    $region42: #{basic_residual_block_forward.1} parent=1 // pred_check
      _
    $region43: #{basic_residual_block_forward.1} parent=1 // pred_check_branch
      %102 = sbr.rel (0) target = $region45
    $region44: #{basic_residual_block_forward.1} parent=1 // pred_region
      %s104 = ssub.s32 16, 16
      %105 = vsyncadd [#allocation12], %s104
      %s107 = sshll.u32 [#allocation13], 4
      %s108 = int_to_ptr.vmem [resolvable:$true] %s107
      %110 = dma.hbm_to_vmem [thread:$0]  %s10, 16, %s108, [#allocation12]
    $region45: #{basic_residual_block_forward.1} parent=1 // pred_fallthru
      _
    // Predicated region
    $region46: #{basic_residual_block_forward.1} parent=1 // pred_check
      _
    $region47: #{basic_residual_block_forward.1} parent=1 // pred_check_branch
      %112 = sbr.rel (0) target = $region49
    $region48: #{basic_residual_block_forward.1} parent=1 // pred_region
      _
    $region49: #{basic_residual_block_forward.1} parent=1 // pred_fallthru
      _
    // Predicated region
    $region50: #{basic_residual_block_forward.1} parent=1 // pred_check
      _
    $region51: #{basic_residual_block_forward.1} parent=1 // pred_check_branch
      %114 = sbr.rel (0) target = $region53
    $region52: #{basic_residual_block_forward.1} parent=1 // pred_region
      _
    $region53: #{basic_residual_block_forward.1} parent=1 // pred_fallthru
      _
    // Predicated region
    $region54: #{basic_residual_block_forward.1} parent=1 // pred_check
      _
    $region55: #{basic_residual_block_forward.1} parent=1 // pred_check_branch
      %116 = sbr.rel (0) target = $region57
    $region56: #{basic_residual_block_forward.1} parent=1 // pred_region
      _
    $region57: #{basic_residual_block_forward.1} parent=1 // pred_fallthru
      _
    // Predicated region
    $region58: #{basic_residual_block_forward.1} parent=1 // pred_check
      _
    $region59: #{basic_residual_block_forward.1} parent=1 // pred_check_branch
      %118 = sbr.rel (0) target = $region61
    $region60: #{basic_residual_block_forward.1} parent=1 // pred_region
      _
    $region61: #{basic_residual_block_forward.1} parent=1 // pred_fallthru
      _
    // Predicated region
    $region62: #{basic_residual_block_forward.1} parent=1 // pred_check
      _
    $region63: #{basic_residual_block_forward.1} parent=1 // pred_check_branch
      %120 = sbr.rel (0) target = $region65
    $region64: #{basic_residual_block_forward.1} parent=1 // pred_region
      %121 = dma.done [#allocation3], 256
    $region65: #{basic_residual_block_forward.1} parent=1 // pred_fallthru
      _
    // Predicated region
    $region66: #{basic_residual_block_forward.1} parent=1 // pred_check
      _
    $region67: #{basic_residual_block_forward.1} parent=1 // pred_check_branch
      %123 = sbr.rel (0) target = $region69
    $region68: #{basic_residual_block_forward.1} parent=1 // pred_region
      %124 = dma.done [#allocation6], 1024
    $region69: #{basic_residual_block_forward.1} parent=1 // pred_fallthru
      _
    // Predicated region
    $region70: #{basic_residual_block_forward.1} parent=1 // pred_check
      _
    $region71: #{basic_residual_block_forward.1} parent=1 // pred_check_branch
      %126 = sbr.rel (0) target = $region73
    $region72: #{basic_residual_block_forward.1} parent=1 // pred_region
      %127 = dma.done [#allocation6], 1024
    $region73: #{basic_residual_block_forward.1} parent=1 // pred_fallthru
      _
    // Predicated region
    $region74: #{basic_residual_block_forward.1} parent=1 // pred_check
      _
    $region75: #{basic_residual_block_forward.1} parent=1 // pred_check_branch
      %129 = sbr.rel (0) target = $region77
    $region76: #{basic_residual_block_forward.1} parent=1 // pred_region
      %130 = dma.done [#allocation9], 16
    $region77: #{basic_residual_block_forward.1} parent=1 // pred_fallthru
      _
    // Predicated region
    $region78: #{basic_residual_block_forward.1} parent=1 // pred_check
      _
    $region79: #{basic_residual_block_forward.1} parent=1 // pred_check_branch
      %132 = sbr.rel (0) target = $region81
    $region80: #{basic_residual_block_forward.1} parent=1 // pred_region
      %133 = dma.done [#allocation9], 16
    $region81: #{basic_residual_block_forward.1} parent=1 // pred_fallthru
      _
    // Predicated region
    $region82: #{basic_residual_block_forward.1} parent=1 // pred_check
      _
    $region83: #{basic_residual_block_forward.1} parent=1 // pred_check_branch
      %135 = sbr.rel (0) target = $region85
    $region84: #{basic_residual_block_forward.1} parent=1 // pred_region
      %136 = dma.done [#allocation12], 1024
    $region85: #{basic_residual_block_forward.1} parent=1 // pred_fallthru
      _
    // Predicated region
    $region86: #{basic_residual_block_forward.1} parent=1 // pred_check
      _
    $region87: #{basic_residual_block_forward.1} parent=1 // pred_check_branch
      %138 = sbr.rel (0) target = $region89
    $region88: #{basic_residual_block_forward.1} parent=1 // pred_region
      %139 = dma.done [#allocation12], 16
    $region89: #{basic_residual_block_forward.1} parent=1 // pred_fallthru
      _
    %v141 = vld [vmem:[%s1] sm:$0xff]
    %v142 = vld [vmem:[%s1 + $0x8] sm:$0xff]
    %v143 = vlaneseq
    %v144 = vand.u32 %v143, 127
    %v145 = vld [vmem:[%s0] sm:$0xff]
    %v146 = vld [vmem:[%s0 + $0x8] sm:$0xff]
    %147 = vset.pattern.permute.xlu0 0
    %148 = vperm.xlu0 %147, %v145
    %v149 = vpop.permute.xlu0 %148
    %150 = vset.pattern.permute.xlu0 0
    %151 = vperm.xlu0 %150, %v146
    %v152 = vpop.permute.xlu0 %151
    %vm153 = vcmp.eq.s32.totalorder %v144, %v149
    %vm154 = vcmp.eq.s32.totalorder %v144, %v152
    %v155 = vsel %vm153, 1, 0
    %v156 = vsel %vm154, 1, 0
    %v157 = vcvt.s32.f32 %v155
    %v158 = vcvt.s32.f32 %v156
    %vm159 = vcmask 130048
    %v161 = vsel %vm159, %v157, 0
    %v164 = vsel %vm159, %v158, 0
    %166 = vmatprep.subr.mxu0 0.0
    %167 = vmatpush1.msra.mxu0 0.0
    %168 = vmatprep.subr.mxu0 0.0
    %169 = vmatpush1.msra.mxu0 0.0
    %170 = vmatprep.subr.mxu0 0.0
    %171 = vmatpush1.msra.mxu0 0.0
    %172 = vmatprep.subr.mxu0 0.0
    %173 = vmatpush1.msra.mxu0 0.0
    %174 = vmatprep.subr.mxu0 0.0
    %175 = vmatpush1.msra.mxu0 0.0
    %176 = vmatprep.subr.mxu0 0.0
    %177 = vmatpush1.msra.mxu0 0.0
    %178 = vmatprep.subr.mxu0 0.0
    %179 = vmatpush1.msra.mxu0 0.0
    %180 = vmatprep.subr.mxu0 0.0
    %181 = vmatpush1.msra.mxu0 0.0
    %182 = vmatprep.subr.mxu0 0.0
    %183 = vmatpush1.msra.mxu0 0.0
    %184 = vmatprep.subr.mxu0 0.0
    %185 = vmatpush1.msra.mxu0 0.0
    %186 = vmatprep.subr.mxu0 0.0
    %187 = vmatpush1.msra.mxu0 0.0
    %188 = vmatprep.subr.mxu0 0.0
    %189 = vmatpush1.msra.mxu0 0.0
    %190 = vmatprep.subr.mxu0 0.0
    %191 = vmatpush1.msra.mxu0 0.0
    %192 = vmatprep.subr.mxu0 0.0
    %193 = vmatpush1.msra.mxu0 0.0
    %194 = vmatprep.subr.mxu0 0.0
    %195 = vmatpush1.msra.mxu0 %v142
    %196 = vmatprep.subr.mxu0 0.0
    %197 = vmatpush1.msra.mxu0 %v141
    %198 = vmatprep.subr.mxu0 0.0
    %199 = vmatpush2.msra.mxu0 0.0
    %200 = vmatprep.subr.mxu0 0.0
    %201 = vmatpush2.msra.mxu0 0.0
    %202 = vmatprep.subr.mxu0 0.0
    %203 = vmatpush2.msra.mxu0 0.0
    %204 = vmatprep.subr.mxu0 0.0
    %205 = vmatpush2.msra.mxu0 0.0
    %206 = vmatprep.subr.mxu0 0.0
    %207 = vmatpush2.msra.mxu0 0.0
    %208 = vmatprep.subr.mxu0 0.0
    %209 = vmatpush2.msra.mxu0 0.0
    %210 = vmatprep.subr.mxu0 0.0
    %211 = vmatpush2.msra.mxu0 0.0
    %212 = vmatprep.subr.mxu0 0.0
    %213 = vmatpush2.msra.mxu0 0.0
    %214 = vmatprep.subr.mxu0 0.0
    %215 = vmatpush2.msra.mxu0 0.0
    %216 = vmatprep.subr.mxu0 0.0
    %217 = vmatpush2.msra.mxu0 0.0
    %218 = vmatprep.subr.mxu0 0.0
    %219 = vmatpush2.msra.mxu0 0.0
    %220 = vmatprep.subr.mxu0 0.0
    %221 = vmatpush2.msra.mxu0 0.0
    %222 = vmatprep.subr.mxu0 0.0
    %223 = vmatpush2.msra.mxu0 0.0
    %224 = vmatprep.subr.mxu0 0.0
    %225 = vmatpush2.msra.mxu0 0.0
    %226 = vmatprep.subr.mxu0 0.0
    %227 = vmatpush2.msra.mxu0 0.0
    %228 = vmatprep.subr.mxu0 0.0
    %229 = vmatpush2.msra.mxu0 0.0
    %230 = vmatprep.mubr.f32.mxu0 0.0
    %231 = vmatmul.mubr.f32.gmra.mxu0 %v161
    %v232 = vpop.f32.mrf.mxu0
    %v233 = vadd.f32 0.0, %v232
    %v234 = vpop.f32.mrf.mxu0
    %235 = vmatprep.mubr.f32.mxu0 0.0
    %236 = vmatmul.mubr.f32.gmra.mxu0 %v164
    %v237 = vpop.f32.mrf.mxu0
    %v238 = vadd.f32 0.0, %v237
    %v239 = vpop.f32.mrf.mxu0
    %240 = vdwg.mxu0
    %v241 = vpack.c.bf16 %v142, %v141
    %v242 = vld [vmem:[#allocation5] sm:$0xf]
    %v243 = vld [vmem:[#allocation5 + $0x4] sm:$0xf]
    %v244 = vld [vmem:[#allocation5 + $0x8] sm:$0xf]
    %v245 = vld [vmem:[#allocation5 + $0xc] sm:$0xf]
    %v246 = vld [vmem:[#allocation5 + $0x10] sm:$0xf]
    %v247 = vld [vmem:[#allocation5 + $0x14] sm:$0xf]
    %v248 = vld [vmem:[#allocation5 + $0x18] sm:$0xf]
    %v249 = vld [vmem:[#allocation5 + $0x1c] sm:$0xf]
    %v250 = vld [vmem:[#allocation5 + $0x20] sm:$0xf]
    %v251 = vld [vmem:[#allocation5 + $0x24] sm:$0xf]
    %v252 = vld [vmem:[#allocation5 + $0x28] sm:$0xf]
    %v253 = vld [vmem:[#allocation5 + $0x2c] sm:$0xf]
    %v254 = vld [vmem:[#allocation5 + $0x30] sm:$0xf]
    %v255 = vld [vmem:[#allocation5 + $0x34] sm:$0xf]
    %v256 = vld [vmem:[#allocation5 + $0x38] sm:$0xf]
    %v257 = vld [vmem:[#allocation5 + $0x3c] sm:$0xf]
    %v258 = vld [vmem:[%s4] sm:$0x1]
    %v260 = vlaneseq
    %v261 = vshrl.u32 %v260, 7
    %v262 = vsub.s32 0, %v261
    %v263 = vrot.slane %v258, %v262
    %v281 = vunpack.c.l.b16 %v242
    %v282 = vunpack.c.l.b16 %v243
    %v283 = vunpack.c.l.b16 %v244
    %v284 = vunpack.c.l.b16 %v245
    %v285 = vunpack.c.l.b16 %v246
    %v286 = vunpack.c.l.b16 %v247
    %v287 = vunpack.c.l.b16 %v248
    %v288 = vunpack.c.l.b16 %v249
    %v289 = vunpack.c.l.b16 %v250
    %v290 = vunpack.c.l.b16 %v251
    %v291 = vunpack.c.l.b16 %v252
    %v292 = vunpack.c.l.b16 %v253
    %v293 = vunpack.c.l.b16 %v254
    %v294 = vunpack.c.l.b16 %v255
    %v295 = vunpack.c.l.b16 %v256
    %v296 = vunpack.c.l.b16 %v257
    %v297 = vpack.c.b16 %v282, %v281
    %v298 = vpack.c.b16 %v284, %v283
    %v299 = vpack.c.b16 %v286, %v285
    %v300 = vpack.c.b16 %v288, %v287
    %v301 = vpack.c.b16 %v290, %v289
    %v302 = vpack.c.b16 %v292, %v291
    %v303 = vpack.c.b16 %v294, %v293
    %v304 = vpack.c.b16 %v296, %v295
    %313 = vmatprep.subr.bf16.mxu0 0
    %314 = vmatpush1.bf16.msra.mxu0 %v304
    %315 = vmatprep.subr.bf16.mxu0 0
    %316 = vmatpush1.bf16.msra.mxu0 %v303
    %317 = vmatprep.subr.bf16.mxu0 0
    %318 = vmatpush1.bf16.msra.mxu0 %v302
    %319 = vmatprep.subr.bf16.mxu0 0
    %320 = vmatpush1.bf16.msra.mxu0 %v301
    %321 = vmatprep.subr.bf16.mxu0 0
    %322 = vmatpush1.bf16.msra.mxu0 %v300
    %323 = vmatprep.subr.bf16.mxu0 0
    %324 = vmatpush1.bf16.msra.mxu0 %v299
    %325 = vmatprep.subr.bf16.mxu0 0
    %326 = vmatpush1.bf16.msra.mxu0 %v298
    %327 = vmatprep.subr.bf16.mxu0 0
    %328 = vmatpush1.bf16.msra.mxu0 %v297
    %329 = vmatprep.subr.bf16.mxu0 0
    %330 = vmatpush2.bf16.msra.mxu0 0
    %331 = vmatprep.subr.bf16.mxu0 0
    %332 = vmatpush2.bf16.msra.mxu0 0
    %333 = vmatprep.subr.bf16.mxu0 0
    %334 = vmatpush2.bf16.msra.mxu0 0
    %335 = vmatprep.subr.bf16.mxu0 0
    %336 = vmatpush2.bf16.msra.mxu0 0
    %337 = vmatprep.subr.bf16.mxu0 0
    %338 = vmatpush2.bf16.msra.mxu0 0
    %339 = vmatprep.subr.bf16.mxu0 0
    %340 = vmatpush2.bf16.msra.mxu0 0
    %341 = vmatprep.subr.bf16.mxu0 0
    %342 = vmatpush2.bf16.msra.mxu0 0
    %343 = vmatprep.subr.bf16.mxu0 0
    %344 = vmatpush2.bf16.msra.mxu0 0
    %345 = vmatprep.mubr.bf16.mxu0 0
    %346 = vmatmul.mubr.bf16.gmra.mxu0 %v241
    %v347 = vpop.f32.mrf.mxu0
    %v348 = vadd.f32 %v263, %v347
    %v349 = vpop.f32.mrf.mxu0
    %v350 = vpop.f32.mrf.mxu0
    %v351 = vadd.f32 %v263, %v350
    %v352 = vpop.f32.mrf.mxu0
    %353 = vdwg.mxu0
    %v354 = vmax.f32 %v348, 0.0
    %v355 = vmax.f32 %v351, 0.0
    %v356 = vld [vmem:[#allocation2] sm:$0xf]
    %v357 = vld [vmem:[#allocation2 + $0x4] sm:$0xf]
    %v358 = vpack.c.bf16 %v355, %v354
    %v361 = vunpack.c.l.b16 %v356
    %v362 = vunpack.c.l.b16 %v357
    %v363 = vpack.c.b16 %v362, %v361
    %v365 = vsel %vm159, %v363, 0
    %367 = vmatprep.subr.bf16.mxu0 0
    %368 = vmatpush1.bf16.msra.mxu0 0
    %369 = vmatprep.subr.bf16.mxu0 0
    %370 = vmatpush1.bf16.msra.mxu0 0
    %371 = vmatprep.subr.bf16.mxu0 0
    %372 = vmatpush1.bf16.msra.mxu0 0
    %373 = vmatprep.subr.bf16.mxu0 0
    %374 = vmatpush1.bf16.msra.mxu0 0
    %375 = vmatprep.subr.bf16.mxu0 0
    %376 = vmatpush1.bf16.msra.mxu0 0
    %377 = vmatprep.subr.bf16.mxu0 0
    %378 = vmatpush1.bf16.msra.mxu0 0
    %379 = vmatprep.subr.bf16.mxu0 0
    %380 = vmatpush1.bf16.msra.mxu0 0
    %381 = vmatprep.subr.bf16.mxu0 0
    %382 = vmatpush1.bf16.msra.mxu0 %v358
    %383 = vmatprep.subr.bf16.mxu0 0
    %384 = vmatpush2.bf16.msra.mxu0 0
    %385 = vmatprep.subr.bf16.mxu0 0
    %386 = vmatpush2.bf16.msra.mxu0 0
    %387 = vmatprep.subr.bf16.mxu0 0
    %388 = vmatpush2.bf16.msra.mxu0 0
    %389 = vmatprep.subr.bf16.mxu0 0
    %390 = vmatpush2.bf16.msra.mxu0 0
    %391 = vmatprep.subr.bf16.mxu0 0
    %392 = vmatpush2.bf16.msra.mxu0 0
    %393 = vmatprep.subr.bf16.mxu0 0
    %394 = vmatpush2.bf16.msra.mxu0 0
    %395 = vmatprep.subr.bf16.mxu0 0
    %396 = vmatpush2.bf16.msra.mxu0 0
    %397 = vmatprep.subr.bf16.mxu0 0
    %398 = vmatpush2.bf16.msra.mxu0 0
    %399 = vmatprep.mubr.bf16.mxu0 0
    %400 = vmatmul.mubr.bf16.gmra.mxu0 %v365
    %v401 = vpop.f32.mrf.mxu0
    %v402 = vadd.f32 0.0, %v401
    %v403 = vpop.f32.mrf.mxu0
    %v404 = vpop.f32.mrf.mxu0
    %v405 = vadd.f32 0.0, %v404
    %v406 = vpop.f32.mrf.mxu0
    %407 = vdwg.mxu0
    %v408 = vpack.c.bf16 %v405, %v402
    %v409 = vld [vmem:[#allocation7] sm:$0xf]
    %v410 = vld [vmem:[#allocation7 + $0x4] sm:$0xf]
    %v411 = vld [vmem:[#allocation7 + $0x8] sm:$0xf]
    %v412 = vld [vmem:[#allocation7 + $0xc] sm:$0xf]
    %v413 = vld [vmem:[#allocation7 + $0x10] sm:$0xf]
    %v414 = vld [vmem:[#allocation7 + $0x14] sm:$0xf]
    %v415 = vld [vmem:[#allocation7 + $0x18] sm:$0xf]
    %v416 = vld [vmem:[#allocation7 + $0x1c] sm:$0xf]
    %v417 = vld [vmem:[#allocation7 + $0x20] sm:$0xf]
    %v418 = vld [vmem:[#allocation7 + $0x24] sm:$0xf]
    %v419 = vld [vmem:[#allocation7 + $0x28] sm:$0xf]
    %v420 = vld [vmem:[#allocation7 + $0x2c] sm:$0xf]
    %v421 = vld [vmem:[#allocation7 + $0x30] sm:$0xf]
    %v422 = vld [vmem:[#allocation7 + $0x34] sm:$0xf]
    %v423 = vld [vmem:[#allocation7 + $0x38] sm:$0xf]
    %v424 = vld [vmem:[#allocation7 + $0x3c] sm:$0xf]
    %v425 = vld [vmem:[%s6] sm:$0x1]
    %v427 = vlaneseq
    %v428 = vshrl.u32 %v427, 7
    %v429 = vsub.s32 0, %v428
    %v430 = vrot.slane %v425, %v429
    %v448 = vunpack.c.l.b16 %v409
    %v449 = vunpack.c.l.b16 %v410
    %v450 = vunpack.c.l.b16 %v411
    %v451 = vunpack.c.l.b16 %v412
    %v452 = vunpack.c.l.b16 %v413
    %v453 = vunpack.c.l.b16 %v414
    %v454 = vunpack.c.l.b16 %v415
    %v455 = vunpack.c.l.b16 %v416
    %v456 = vunpack.c.l.b16 %v417
    %v457 = vunpack.c.l.b16 %v418
    %v458 = vunpack.c.l.b16 %v419
    %v459 = vunpack.c.l.b16 %v420
    %v460 = vunpack.c.l.b16 %v421
    %v461 = vunpack.c.l.b16 %v422
    %v462 = vunpack.c.l.b16 %v423
    %v463 = vunpack.c.l.b16 %v424
    %v464 = vpack.c.b16 %v449, %v448
    %v465 = vpack.c.b16 %v451, %v450
    %v466 = vpack.c.b16 %v453, %v452
    %v467 = vpack.c.b16 %v455, %v454
    %v468 = vpack.c.b16 %v457, %v456
    %v469 = vpack.c.b16 %v459, %v458
    %v470 = vpack.c.b16 %v461, %v460
    %v471 = vpack.c.b16 %v463, %v462
    %480 = vmatprep.subr.bf16.mxu0 0
    %481 = vmatpush1.bf16.msra.mxu0 %v471
    %482 = vmatprep.subr.bf16.mxu0 0
    %483 = vmatpush1.bf16.msra.mxu0 %v470
    %484 = vmatprep.subr.bf16.mxu0 0
    %485 = vmatpush1.bf16.msra.mxu0 %v469
    %486 = vmatprep.subr.bf16.mxu0 0
    %487 = vmatpush1.bf16.msra.mxu0 %v468
    %488 = vmatprep.subr.bf16.mxu0 0
    %489 = vmatpush1.bf16.msra.mxu0 %v467
    %490 = vmatprep.subr.bf16.mxu0 0
    %491 = vmatpush1.bf16.msra.mxu0 %v466
    %492 = vmatprep.subr.bf16.mxu0 0
    %493 = vmatpush1.bf16.msra.mxu0 %v465
    %494 = vmatprep.subr.bf16.mxu0 0
    %495 = vmatpush1.bf16.msra.mxu0 %v464
    %496 = vmatprep.subr.bf16.mxu0 0
    %497 = vmatpush2.bf16.msra.mxu0 0
    %498 = vmatprep.subr.bf16.mxu0 0
    %499 = vmatpush2.bf16.msra.mxu0 0
    %500 = vmatprep.subr.bf16.mxu0 0
    %501 = vmatpush2.bf16.msra.mxu0 0
    %502 = vmatprep.subr.bf16.mxu0 0
    %503 = vmatpush2.bf16.msra.mxu0 0
    %504 = vmatprep.subr.bf16.mxu0 0
    %505 = vmatpush2.bf16.msra.mxu0 0
    %506 = vmatprep.subr.bf16.mxu0 0
    %507 = vmatpush2.bf16.msra.mxu0 0
    %508 = vmatprep.subr.bf16.mxu0 0
    %509 = vmatpush2.bf16.msra.mxu0 0
    %510 = vmatprep.subr.bf16.mxu0 0
    %511 = vmatpush2.bf16.msra.mxu0 0
    %512 = vmatprep.mubr.bf16.mxu0 0
    %513 = vmatmul.mubr.bf16.gmra.mxu0 %v408
    %v514 = vpop.f32.mrf.mxu0
    %v515 = vadd.f32 %v430, %v514
    %v516 = vpop.f32.mrf.mxu0
    %v517 = vpop.f32.mrf.mxu0
    %v518 = vadd.f32 %v430, %v517
    %v519 = vpop.f32.mrf.mxu0
    %520 = vdwg.mxu0
    %v521 = vmax.f32 %v515, 0.0
    %v522 = vmax.f32 %v518, 0.0
    %v523 = vld [vmem:[#allocation8] sm:$0x1]
    %v525 = vlaneseq
    %v526 = vshrl.u32 %v525, 7
    %v527 = vsub.s32 0, %v526
    %v528 = vrot.slane %v523, %v527
    %v530 = vmul.f32 %v521, %v528
    %v531 = vmul.f32 %v522, %v528
    %v532 = vld [vmem:[#allocation10] sm:$0x1]
    %v534 = vlaneseq
    %v535 = vshrl.u32 %v534, 7
    %v536 = vsub.s32 0, %v535
    %v537 = vrot.slane %v532, %v536
    %v539 = vadd.f32 %v530, %v537
    %v540 = vadd.f32 %v531, %v537
    %v541 = vpack.c.bf16 %v540, %v539
    %v542 = vld [vmem:[#allocation11] sm:$0xf]
    %v543 = vld [vmem:[#allocation11 + $0x4] sm:$0xf]
    %v544 = vld [vmem:[#allocation11 + $0x8] sm:$0xf]
    %v545 = vld [vmem:[#allocation11 + $0xc] sm:$0xf]
    %v546 = vld [vmem:[#allocation11 + $0x10] sm:$0xf]
    %v547 = vld [vmem:[#allocation11 + $0x14] sm:$0xf]
    %v548 = vld [vmem:[#allocation11 + $0x18] sm:$0xf]
    %v549 = vld [vmem:[#allocation11 + $0x1c] sm:$0xf]
    %v550 = vld [vmem:[#allocation11 + $0x20] sm:$0xf]
    %v551 = vld [vmem:[#allocation11 + $0x24] sm:$0xf]
    %v552 = vld [vmem:[#allocation11 + $0x28] sm:$0xf]
    %v553 = vld [vmem:[#allocation11 + $0x2c] sm:$0xf]
    %v554 = vld [vmem:[#allocation11 + $0x30] sm:$0xf]
    %v555 = vld [vmem:[#allocation11 + $0x34] sm:$0xf]
    %v556 = vld [vmem:[#allocation11 + $0x38] sm:$0xf]
    %v557 = vld [vmem:[#allocation11 + $0x3c] sm:$0xf]
    %v558 = vld [vmem:[#allocation13] sm:$0x1]
    %v560 = vlaneseq
    %v561 = vshrl.u32 %v560, 7
    %v562 = vsub.s32 0, %v561
    %v563 = vrot.slane %v558, %v562
    %v581 = vunpack.c.l.b16 %v542
    %v582 = vunpack.c.l.b16 %v543
    %v583 = vunpack.c.l.b16 %v544
    %v584 = vunpack.c.l.b16 %v545
    %v585 = vunpack.c.l.b16 %v546
    %v586 = vunpack.c.l.b16 %v547
    %v587 = vunpack.c.l.b16 %v548
    %v588 = vunpack.c.l.b16 %v549
    %v589 = vunpack.c.l.b16 %v550
    %v590 = vunpack.c.l.b16 %v551
    %v591 = vunpack.c.l.b16 %v552
    %v592 = vunpack.c.l.b16 %v553
    %v593 = vunpack.c.l.b16 %v554
    %v594 = vunpack.c.l.b16 %v555
    %v595 = vunpack.c.l.b16 %v556
    %v596 = vunpack.c.l.b16 %v557
    %v597 = vpack.c.b16 %v582, %v581
    %v598 = vpack.c.b16 %v584, %v583
    %v599 = vpack.c.b16 %v586, %v585
    %v600 = vpack.c.b16 %v588, %v587
    %v601 = vpack.c.b16 %v590, %v589
    %v602 = vpack.c.b16 %v592, %v591
    %v603 = vpack.c.b16 %v594, %v593
    %v604 = vpack.c.b16 %v596, %v595
    %613 = vmatprep.subr.bf16.mxu0 0
    %614 = vmatpush1.bf16.msra.mxu0 %v604
    %615 = vmatprep.subr.bf16.mxu0 0
    %616 = vmatpush1.bf16.msra.mxu0 %v603
    %617 = vmatprep.subr.bf16.mxu0 0
    %618 = vmatpush1.bf16.msra.mxu0 %v602
    %619 = vmatprep.subr.bf16.mxu0 0
    %620 = vmatpush1.bf16.msra.mxu0 %v601
    %621 = vmatprep.subr.bf16.mxu0 0
    %622 = vmatpush1.bf16.msra.mxu0 %v600
    %623 = vmatprep.subr.bf16.mxu0 0
    %624 = vmatpush1.bf16.msra.mxu0 %v599
    %625 = vmatprep.subr.bf16.mxu0 0
    %626 = vmatpush1.bf16.msra.mxu0 %v598
    %627 = vmatprep.subr.bf16.mxu0 0
    %628 = vmatpush1.bf16.msra.mxu0 %v597
    %629 = vmatprep.subr.bf16.mxu0 0
    %630 = vmatpush2.bf16.msra.mxu0 0
    %631 = vmatprep.subr.bf16.mxu0 0
    %632 = vmatpush2.bf16.msra.mxu0 0
    %633 = vmatprep.subr.bf16.mxu0 0
    %634 = vmatpush2.bf16.msra.mxu0 0
    %635 = vmatprep.subr.bf16.mxu0 0
    %636 = vmatpush2.bf16.msra.mxu0 0
    %637 = vmatprep.subr.bf16.mxu0 0
    %638 = vmatpush2.bf16.msra.mxu0 0
    %639 = vmatprep.subr.bf16.mxu0 0
    %640 = vmatpush2.bf16.msra.mxu0 0
    %641 = vmatprep.subr.bf16.mxu0 0
    %642 = vmatpush2.bf16.msra.mxu0 0
    %643 = vmatprep.subr.bf16.mxu0 0
    %644 = vmatpush2.bf16.msra.mxu0 0
    %645 = vmatprep.mubr.bf16.mxu0 0
    %646 = vmatmul.mubr.bf16.gmra.mxu0 %v541
    %v647 = vpop.f32.mrf.mxu0
    %v648 = vadd.f32 %v563, %v647
    %v649 = vpop.f32.mrf.mxu0
    %v650 = vpop.f32.mrf.mxu0
    %v651 = vadd.f32 %v563, %v650
    %v652 = vpop.f32.mrf.mxu0
    %653 = vdwg.mxu0
    %v654 = vmax.f32 %v648, 0.0
    %v655 = vmax.f32 %v651, 0.0
    %s656 = scalar_lea.vmem [#allocation2], 8
    %v657 = vld [vmem:[%s656] sm:$0xf]
    %v658 = vld [vmem:[%s656 + $0x4] sm:$0xf]
    %v659 = vpack.c.bf16 %v655, %v654
    %v662 = vunpack.c.l.b16 %v657
    %v663 = vunpack.c.l.b16 %v658
    %v664 = vpack.c.b16 %v663, %v662
    %v666 = vsel %vm159, %v664, 0
    %668 = vmatprep.subr.bf16.mxu0 0
    %669 = vmatpush1.bf16.msra.mxu0 0
    %670 = vmatprep.subr.bf16.mxu0 0
    %671 = vmatpush1.bf16.msra.mxu0 0
    %672 = vmatprep.subr.bf16.mxu0 0
    %673 = vmatpush1.bf16.msra.mxu0 0
    %674 = vmatprep.subr.bf16.mxu0 0
    %675 = vmatpush1.bf16.msra.mxu0 0
    %676 = vmatprep.subr.bf16.mxu0 0
    %677 = vmatpush1.bf16.msra.mxu0 0
    %678 = vmatprep.subr.bf16.mxu0 0
    %679 = vmatpush1.bf16.msra.mxu0 0
    %680 = vmatprep.subr.bf16.mxu0 0
    %681 = vmatpush1.bf16.msra.mxu0 0
    %682 = vmatprep.subr.bf16.mxu0 0
    %683 = vmatpush1.bf16.msra.mxu0 %v659
    %684 = vmatprep.subr.bf16.mxu0 0
    %685 = vmatpush2.bf16.msra.mxu0 0
    %686 = vmatprep.subr.bf16.mxu0 0
    %687 = vmatpush2.bf16.msra.mxu0 0
    %688 = vmatprep.subr.bf16.mxu0 0
    %689 = vmatpush2.bf16.msra.mxu0 0
    %690 = vmatprep.subr.bf16.mxu0 0
    %691 = vmatpush2.bf16.msra.mxu0 0
    %692 = vmatprep.subr.bf16.mxu0 0
    %693 = vmatpush2.bf16.msra.mxu0 0
    %694 = vmatprep.subr.bf16.mxu0 0
    %695 = vmatpush2.bf16.msra.mxu0 0
    %696 = vmatprep.subr.bf16.mxu0 0
    %697 = vmatpush2.bf16.msra.mxu0 0
    %698 = vmatprep.subr.bf16.mxu0 0
    %699 = vmatpush2.bf16.msra.mxu0 0
    %700 = vmatprep.mubr.bf16.mxu0 0
    %701 = vmatmul.mubr.bf16.gmra.mxu0 %v666
    %v702 = vpop.f32.mrf.mxu0
    %v703 = vadd.f32 0.0, %v702
    %v704 = vpop.f32.mrf.mxu0
    %v705 = vpop.f32.mrf.mxu0
    %v706 = vadd.f32 0.0, %v705
    %v707 = vpop.f32.mrf.mxu0
    %708 = vdwg.mxu0
    %v709 = vpack.c.bf16 %v706, %v703
    %v710 = vld [vmem:[%s11] sm:$0xf]
    %v711 = vld [vmem:[%s11 + $0x4] sm:$0xf]
    %v712 = vld [vmem:[%s11 + $0x8] sm:$0xf]
    %v713 = vld [vmem:[%s11 + $0xc] sm:$0xf]
    %v714 = vld [vmem:[%s11 + $0x10] sm:$0xf]
    %v715 = vld [vmem:[%s11 + $0x14] sm:$0xf]
    %v716 = vld [vmem:[%s11 + $0x18] sm:$0xf]
    %v717 = vld [vmem:[%s11 + $0x1c] sm:$0xf]
    %v718 = vld [vmem:[%s11 + $0x20] sm:$0xf]
    %v719 = vld [vmem:[%s11 + $0x24] sm:$0xf]
    %v720 = vld [vmem:[%s11 + $0x28] sm:$0xf]
    %v721 = vld [vmem:[%s11 + $0x2c] sm:$0xf]
    %v722 = vld [vmem:[%s11 + $0x30] sm:$0xf]
    %v723 = vld [vmem:[%s11 + $0x34] sm:$0xf]
    %v724 = vld [vmem:[%s11 + $0x38] sm:$0xf]
    %v725 = vld [vmem:[%s11 + $0x3c] sm:$0xf]
    %v726 = vld [vmem:[%s12] sm:$0x1]
    %v728 = vlaneseq
    %v729 = vshrl.u32 %v728, 7
    %v730 = vsub.s32 0, %v729
    %v731 = vrot.slane %v726, %v730
    %v749 = vunpack.c.l.b16 %v710
    %v750 = vunpack.c.l.b16 %v711
    %v751 = vunpack.c.l.b16 %v712
    %v752 = vunpack.c.l.b16 %v713
    %v753 = vunpack.c.l.b16 %v714
    %v754 = vunpack.c.l.b16 %v715
    %v755 = vunpack.c.l.b16 %v716
    %v756 = vunpack.c.l.b16 %v717
    %v757 = vunpack.c.l.b16 %v718
    %v758 = vunpack.c.l.b16 %v719
    %v759 = vunpack.c.l.b16 %v720
    %v760 = vunpack.c.l.b16 %v721
    %v761 = vunpack.c.l.b16 %v722
    %v762 = vunpack.c.l.b16 %v723
    %v763 = vunpack.c.l.b16 %v724
    %v764 = vunpack.c.l.b16 %v725
    %v765 = vpack.c.b16 %v750, %v749
    %v766 = vpack.c.b16 %v752, %v751
    %v767 = vpack.c.b16 %v754, %v753
    %v768 = vpack.c.b16 %v756, %v755
    %v769 = vpack.c.b16 %v758, %v757
    %v770 = vpack.c.b16 %v760, %v759
    %v771 = vpack.c.b16 %v762, %v761
    %v772 = vpack.c.b16 %v764, %v763
    %781 = vmatprep.subr.bf16.mxu0 0
    %782 = vmatpush1.bf16.msra.mxu0 %v772
    %783 = vmatprep.subr.bf16.mxu0 0
    %784 = vmatpush1.bf16.msra.mxu0 %v771
    %785 = vmatprep.subr.bf16.mxu0 0
    %786 = vmatpush1.bf16.msra.mxu0 %v770
    %787 = vmatprep.subr.bf16.mxu0 0
    %788 = vmatpush1.bf16.msra.mxu0 %v769
    %789 = vmatprep.subr.bf16.mxu0 0
    %790 = vmatpush1.bf16.msra.mxu0 %v768
    %791 = vmatprep.subr.bf16.mxu0 0
    %792 = vmatpush1.bf16.msra.mxu0 %v767
    %793 = vmatprep.subr.bf16.mxu0 0
    %794 = vmatpush1.bf16.msra.mxu0 %v766
    %795 = vmatprep.subr.bf16.mxu0 0
    %796 = vmatpush1.bf16.msra.mxu0 %v765
    %797 = vmatprep.subr.bf16.mxu0 0
    %798 = vmatpush2.bf16.msra.mxu0 0
    %799 = vmatprep.subr.bf16.mxu0 0
    %800 = vmatpush2.bf16.msra.mxu0 0
    %801 = vmatprep.subr.bf16.mxu0 0
    %802 = vmatpush2.bf16.msra.mxu0 0
    %803 = vmatprep.subr.bf16.mxu0 0
    %804 = vmatpush2.bf16.msra.mxu0 0
    %805 = vmatprep.subr.bf16.mxu0 0
    %806 = vmatpush2.bf16.msra.mxu0 0
    %807 = vmatprep.subr.bf16.mxu0 0
    %808 = vmatpush2.bf16.msra.mxu0 0
    %809 = vmatprep.subr.bf16.mxu0 0
    %810 = vmatpush2.bf16.msra.mxu0 0
    %811 = vmatprep.subr.bf16.mxu0 0
    %812 = vmatpush2.bf16.msra.mxu0 0
    %813 = vmatprep.mubr.bf16.mxu0 0
    %814 = vmatmul.mubr.bf16.gmra.mxu0 %v709
    %v815 = vpop.f32.mrf.mxu0
    %v816 = vadd.f32 %v731, %v815
    %v817 = vpop.f32.mrf.mxu0
    %v818 = vpop.f32.mrf.mxu0
    %v819 = vadd.f32 %v731, %v818
    %v820 = vpop.f32.mrf.mxu0
    %821 = vdwg.mxu0
    %v822 = vmax.f32 %v816, 0.0
    %v823 = vmax.f32 %v819, 0.0
    %v824 = vld [vmem:[%s13] sm:$0x1]
    %v826 = vlaneseq
    %v827 = vshrl.u32 %v826, 7
    %v828 = vsub.s32 0, %v827
    %v829 = vrot.slane %v824, %v828
    %v831 = vmul.f32 %v822, %v829
    %v832 = vmul.f32 %v823, %v829
    %v833 = vld [vmem:[%s14] sm:$0x1]
    %v835 = vlaneseq
    %v836 = vshrl.u32 %v835, 7
    %v837 = vsub.s32 0, %v836
    %v838 = vrot.slane %v833, %v837
    %v840 = vadd.f32 %v831, %v838
    %v841 = vadd.f32 %v832, %v838
    %v842 = vadd.f32 %v840, %v233
    %v843 = vadd.f32 %v841, %v238
    %844 = vst [vmem:[#allocation14] sm:$0xff] %v842
    %845 = vst [vmem:[#allocation14 + $0x8] sm:$0xff] %v843
    // Predicated region
    $region90: #{basic_residual_block_forward.1} parent=1 // pred_check
      _
    $region91: #{basic_residual_block_forward.1} parent=1 // pred_check_branch
      %847 = sbr.rel (0) target = $region93
    $region92: #{basic_residual_block_forward.1} parent=1 // pred_region
      %s849 = ssub.s32 256, 256
      %850 = vsyncadd [#allocation4], %s849
      %s851 = sshll.u32 [#allocation14], 4
      %s852 = int_to_ptr.vmem [resolvable:$true] %s851
      %857 = dma.vmem_to_hbm [thread:$0]  %s852, 256, %s15, [#allocation4], 128, 128, 8
    $region93: #{basic_residual_block_forward.1} parent=1 // pred_fallthru
      _
    // Predicated region
    $region94: #{basic_residual_block_forward.1} parent=1 // pred_check
      _
    $region95: #{basic_residual_block_forward.1} parent=1 // pred_check_branch
      %859 = sbr.rel (0) target = $region97
    $region96: #{basic_residual_block_forward.1} parent=1 // pred_region
      %860 = dma.done [#allocation4], 256
    $region97: #{basic_residual_block_forward.1} parent=1 // pred_fallthru
      _
    %861 = vsyncpa [#allocation3], 1
    %862 = vsyncpa [#allocation6], 1
    %863 = vsyncpa [#allocation9], 1
    %864 = vsyncpa [#allocation12], 1
    %865 = vsyncpa [#allocation4], 1

</llo_original>
